<compile_context>
chip_gen: v6e
topology: v6e:2x2x1
jax: 0.10.0
libtpu: 0.0.40
codegen_flags: <defaults>
</compile_context>

<pallas_src>
import jax
import jax.numpy as jnp
from jax import lax
from jax.experimental import pallas as pl
from jax.experimental.pallas import tpu as pltpu


def single_hop_kernel(kb_ref,     # (TB, N, D)   kb tile (f32 or bf16)
                      q_ref,      # (TB, E)      question vectors
                      wq_ref,     # (E, D)       Linear_q weight (stored transposed)
                      bq_ref,     # (1, D)       Linear_q bias
                      watt_ref,   # (1, D)       Linear_att weight row
                      batt_ref,   # (1, 1)       Linear_att bias
                      nobj_ref,   # (TB, 1, 1)   imagesObjectNum (int32)
                      o_ref):     # (TB, 1, D)   x_att tile
    f32 = jnp.float32
    kb = kb_ref[...]                                            # (TB, N, D) native dtype
    mxu_dt = kb.dtype                                           # bf16 kb -> bf16 MXU inputs

    # proj_q = vecQuestions @ Wq + bq  (MXU, f32)
    proj = jnp.dot(q_ref[...].astype(f32), wq_ref[...],
                   preferred_element_type=f32) + bq_ref[...]    # (TB, D)

    # Fold F.normalize(kb * proj) . watt into per-(row, object) scalars:
    #   dotw  = sum_d kb   * (proj * watt)      (MXU)
    #   sumsq = sum_d kb^2 * (proj * proj)      (MXU)
    #   raw   = dotw / max(sqrt(sumsq), 1e-12) + batt
    pw = (proj * watt_ref[...])[:, None, :].astype(mxu_dt)      # (TB, 1, D)
    pp = (proj * proj)[:, None, :].astype(mxu_dt)               # (TB, 1, D)
    kbsq = kb * kb                                              # (TB, N, D) native dtype
    dotw = jnp.einsum('bkd,bnd->bkn', pw, kb,
                      preferred_element_type=f32)               # (TB, 1, N) f32
    sumsq = jnp.einsum('bkd,bnd->bkn', pp, kbsq,
                       preferred_element_type=f32)              # (TB, 1, N) f32

    inv_nrm = pl.reciprocal(jnp.maximum(jnp.sqrt(sumsq), f32(1e-12)),
                            approx=False)                       # exact: O(TB*N) only
    raw = dotw * inv_nrm + batt_ref[0, 0]                       # (TB, 1, N)

    # apply_mask1d: object index >= imagesObjectNum -> -1e30 (lane-dense mask)
    idx = lax.broadcasted_iota(jnp.int32, raw.shape, 2)
    masked = jnp.where(idx >= nobj_ref[...], f32(-1e30), raw)

    # Stable softmax over objects (lane axis), per batch row.
    m = jnp.max(masked, axis=-1, keepdims=True)                 # (TB, 1, 1)
    e = jnp.exp(masked - m)
    att = e * pl.reciprocal(jnp.sum(e, axis=-1, keepdims=True), approx=False)

    # x_att = bmm(att[:, None, :], kb) on the MXU, f32 accumulation.
    # att stays f32 on the f32-kb path (exactness); bf16 only on the bf16 path.
    x_att = jnp.einsum('bkn,bnd->bkd', att.astype(mxu_dt), kb,
                       preferred_element_type=f32)              # (TB, 1, D)
    o_ref[...] = x_att.astype(o_ref.dtype)


def _vmem_budget_and_limit():
    """Generation-aware VMEM tile budget + scoped-VMEM limit to request."""
    cap = 64 * 1024 * 1024                       # conservative fallback (v7x per-TC VMEM)
    try:
        info = pltpu.get_tpu_info()
        queried = int(getattr(info, "vmem_capacity_bytes", 0) or 0)
        if queried > 0:
            cap = queried
    except Exception:
        pass
    budget = min(int(cap * 0.35), 32 * 1024 * 1024)   # kb double-buffer + temporaries
    limit = min(int(cap * 0.75), 96 * 1024 * 1024)    # explicit vmem_limit_bytes
    return budget, limit


def _pick_tb(B, N, D, kb_itemsize):
    """Pick the batch tile TB and the scoped-VMEM limit.

    Per-row accounting: 2x kb tile (double buffer) + 1x kb value copy + 1x kb*kb
    temporary, all in kb's native dtype, padded to (8,128); +4 B/elem headroom
    for f32 intermediates / compiler scratch.
    """
    n_pad = -(-N // 8) * 8
    d_pad = -(-D // 128) * 128
    budget, vmem_limit = _vmem_budget_and_limit()
    per_row = n_pad * d_pad * (3 * kb_itemsize + 4)
    tb = max(int(budget // per_row), 1)
    tb = min(tb, 128)                     # bound per-step unrolled batched matmuls
    if tb >= B:
        if B >= 16:
            # Guarantee >= 2 grid steps so ("parallel",) can use both v7x TensorCores.
            tb = -(-((B + 1) // 2) // 8) * 8
        else:
            tb = B                        # tiny batch: single full-batch tile
    elif tb >= 8:
        tb = (tb // 8) * 8                # sublane-aligned (TB,*) blocks
    # TODO(synk): add an N-tiled online-softmax fallback for very large N*D where
    # even TB < 8 would exceed the per-core VMEM budget (relevant on v7x's 64 MiB).
    return int(tb), int(vmem_limit)


def single_hop(kb, vecQuestions, imagesObjectNum, wq, bq, watt, batt):
    """kb: (B,N,D)  vecQuestions: (B,E)  imagesObjectNum: (B,) int
       wq: (E,D)  bq: (1,D)  watt: (1,D)  batt: (1,1)  ->  (B,D)"""
    B, N, D = kb.shape
    E = vecQuestions.shape[1]
    TB, vmem_limit = _pick_tb(B, N, D, jnp.dtype(kb.dtype).itemsize)

    nobj = imagesObjectNum.astype(jnp.int32).reshape(B, 1, 1)

    grid_spec = pltpu.PrefetchScalarGridSpec(
        num_scalar_prefetch=0,
        grid=(pl.cdiv(B, TB),),                              # ragged tail: partial block
        in_specs=[
            pl.BlockSpec((TB, N, D), lambda i: (i, 0, 0)),   # kb tile (streamed)
            pl.BlockSpec((TB, E),    lambda i: (i, 0)),      # questions tile
            pl.BlockSpec((E, D),     lambda i: (0, 0)),      # wq (resident)
            pl.BlockSpec((1, D),     lambda i: (0, 0)),      # bq
            pl.BlockSpec((1, D),     lambda i: (0, 0)),      # watt
            pl.BlockSpec((1, 1),     lambda i: (0, 0)),      # batt
            pl.BlockSpec((TB, 1, 1), lambda i: (i, 0, 0)),   # imagesObjectNum tile
        ],
        out_specs=pl.BlockSpec((TB, 1, D), lambda i: (i, 0, 0)),
    )
    out = pl.pallas_call(
        single_hop_kernel,
        out_shape=jax.ShapeDtypeStruct((B, 1, D), kb.dtype),
        grid_spec=grid_spec,
        compiler_params=pltpu.CompilerParams(
            dimension_semantics=("parallel",),
            vmem_limit_bytes=vmem_limit),
    )(kb, vecQuestions, wq, bq, watt, batt, nobj)
    return out.reshape(B, D)


def ref_single_hop(kb, q, nobj, wq, bq, watt, batt):
    kb32 = kb.astype(jnp.float32)
    proj = q.astype(jnp.float32) @ wq + bq                     # (B, D)
    inter = kb32 * proj[:, None, :]
    nrm = jnp.sqrt(jnp.sum(inter * inter, axis=-1, keepdims=True))
    normed = inter / jnp.maximum(nrm, 1e-12)
    raw = jnp.sum(normed * watt[None], axis=-1) + batt[0, 0]
    idx = jnp.arange(kb.shape[1])[None, :]
    raw = jnp.where(idx >= nobj[:, None], -1e30, raw)
    att = jax.nn.softmax(raw, axis=-1)
    return jnp.einsum('bn,bnd->bd', att, kb32)


if __name__ == "__main__":
    B, N = 2, 8          # batch, number of objects
    ENC_DIM = 16
    CTX_DIM = 32         # NOTE: production use should pick CTX_DIM as a multiple of 128

    key = jax.random.PRNGKey(0)
    k1, k2, k3, k4, k5, k6 = jax.random.split(key, 6)

    kb = jax.random.normal(k1, (B, N, CTX_DIM), dtype=jnp.float32)
    vecQuestions = jax.random.normal(k2, (B, ENC_DIM), dtype=jnp.float32)
    imagesObjectNum = jnp.array([N, 5], dtype=jnp.int32)

    # Deterministic synthetic parameters (shapes match nn.Linear(ENC,CTX) / Linear(CTX,1)).
    wq = 0.1 * jax.random.normal(k3, (ENC_DIM, CTX_DIM), dtype=jnp.float32)   # weight^T
    bq = 0.1 * jax.random.normal(k4, (1, CTX_DIM), dtype=jnp.float32)
    watt = 0.1 * jax.random.normal(k5, (1, CTX_DIM), dtype=jnp.float32)
    batt = 0.1 * jax.random.normal(k6, (1, 1), dtype=jnp.float32)

    # f32 path: matches the PyTorch module / pure-JAX reference to 1e-5.
    out = single_hop(kb, vecQuestions, imagesObjectNum, wq, bq, watt, batt)
    out = jax.block_until_ready(out)
    ref = ref_single_hop(kb, vecQuestions, imagesObjectNum, wq, bq, watt, batt)
    assert out.shape == (B, CTX_DIM)
    assert jnp.allclose(out, ref, atol=1e-5, rtol=1e-5)

    # bf16-kb path (halves HBM traffic of the dominant input); MXU accumulates in
    # f32, output is bf16, so compare at bf16-appropriate tolerance.
    kb_bf16 = kb.astype(jnp.bfloat16)
    out_bf16 = single_hop(kb_bf16, vecQuestions, imagesObjectNum, wq, bq, watt, batt)
    out_bf16 = jax.block_until_ready(out_bf16)
    ref_bf16 = ref_single_hop(kb_bf16, vecQuestions, imagesObjectNum, wq, bq, watt, batt)
    assert out_bf16.dtype == jnp.bfloat16
    assert jnp.allclose(out_bf16.astype(jnp.float32), ref_bf16, atol=3e-2, rtol=3e-2)

    print("KERNEL_OK")
</pallas_src>

<mosaic_0001>
module attributes {stable_mosaic.version = 11 : i64} {
  func.func @single_hop_kernel(%arg0: i32, %arg1: memref<2x8x32xf32, #tpu.memory_space<vmem>>, %arg2: memref<2x16xf32, #tpu.memory_space<vmem>>, %arg3: memref<16x32xf32, #tpu.memory_space<vmem>>, %arg4: memref<1x32xf32, #tpu.memory_space<vmem>>, %arg5: memref<1x32xf32, #tpu.memory_space<vmem>>, %arg6: memref<1x1xf32, #tpu.memory_space<vmem>>, %arg7: memref<2x1x1xi32, #tpu.memory_space<vmem>>, %arg8: memref<2x1x32xf32, #tpu.memory_space<vmem>>) attributes {dimension_semantics = [#tpu.dimension_semantics<parallel>], iteration_bounds = array<i64: 1>, scalar_prefetch = 0 : i64, scratch_operands = 0 : i64, tpu.core_type = #tpu.core_type<tc>, window_params = [{transform_indices = @transform_0, window_bounds = array<i64: 2, 8, 32>}, {transform_indices = @transform_1, window_bounds = array<i64: 2, 16>}, {pipeline_mode = #tpu.pipeline_mode<synchronous>, transform_indices = @transform_2, window_bounds = array<i64: 16, 32>}, {pipeline_mode = #tpu.pipeline_mode<synchronous>, transform_indices = @transform_3, window_bounds = array<i64: 1, 32>}, {pipeline_mode = #tpu.pipeline_mode<synchronous>, transform_indices = @transform_4, window_bounds = array<i64: 1, 32>}, {pipeline_mode = #tpu.pipeline_mode<synchronous>, transform_indices = @transform_5, window_bounds = array<i64: 1, 1>}, {transform_indices = @transform_6, window_bounds = array<i64: 2, 1, 1>}, {transform_indices = @transform_7, window_bounds = array<i64: 2, 1, 32>}]} {
    %c0 = arith.constant 0 : index
    %c0_0 = arith.constant 0 : index
    %c0_1 = arith.constant 0 : index
    %0 = vector.load %arg1[%c0, %c0_0, %c0_1] : memref<2x8x32xf32, #tpu.memory_space<vmem>>, vector<2x8x32xf32>
    %c0_2 = arith.constant 0 : index
    %c0_3 = arith.constant 0 : index
    %1 = vector.load %arg2[%c0_2, %c0_3] : memref<2x16xf32, #tpu.memory_space<vmem>>, vector<2x16xf32>
    %c0_4 = arith.constant 0 : index
    %c0_5 = arith.constant 0 : index
    %2 = vector.load %arg3[%c0_4, %c0_5] : memref<16x32xf32, #tpu.memory_space<vmem>>, vector<16x32xf32>
    %cst = arith.constant dense<0.000000e+00> : vector<2x32xf32>
    %3 = tpu.matmul %1, %2, %cst {dimension_numbers = #tpu.dot_dimension_numbers<[1], [0], [0], [1], [0, 0, 1, 1], [], []>} : vector<2x16xf32>, vector<16x32xf32>, vector<2x32xf32> -> vector<2x32xf32>
    %c0_6 = arith.constant 0 : index
    %c0_7 = arith.constant 0 : index
    %4 = vector.load %arg4[%c0_6, %c0_7] : memref<1x32xf32, #tpu.memory_space<vmem>>, vector<1x32xf32>
    %5 = vector.broadcast %4 : vector<1x32xf32> to vector<2x32xf32>
    %6 = arith.addf %3, %5 : vector<2x32xf32>
    %c0_8 = arith.constant 0 : index
    %c0_9 = arith.constant 0 : index
    %7 = vector.load %arg5[%c0_8, %c0_9] : memref<1x32xf32, #tpu.memory_space<vmem>>, vector<1x32xf32>
    %8 = vector.broadcast %7 : vector<1x32xf32> to vector<2x32xf32>
    %9 = arith.mulf %6, %8 : vector<2x32xf32>
    %10 = vector.shape_cast %9 : vector<2x32xf32> to vector<2x1x32xf32>
    %11 = arith.mulf %6, %6 : vector<2x32xf32>
    %12 = vector.shape_cast %11 : vector<2x32xf32> to vector<2x1x32xf32>
    %13 = arith.mulf %0, %0 : vector<2x8x32xf32>
    "tpu.trace_start"() <{level = 10 : i32, message = "bkd,bnd->bkn"}> : () -> ()
    %cst_10 = arith.constant dense<0.000000e+00> : vector<2x1x8xf32>
    %14 = tpu.matmul %10, %0, %cst_10 {dimension_numbers = #tpu.dot_dimension_numbers<[2], [2], [1], [1], [0, 0, 0, 1, 1, 1], [0], [0]>} : vector<2x1x32xf32>, vector<2x8x32xf32>, vector<2x1x8xf32> -> vector<2x1x8xf32>
    %cst_11 = arith.constant dense<0.000000e+00> : vector<2x1x8xf32>
    %15 = tpu.matmul %12, %13, %cst_11 {dimension_numbers = #tpu.dot_dimension_numbers<[2], [2], [1], [1], [0, 0, 0, 1, 1, 1], [0], [0]>} : vector<2x1x32xf32>, vector<2x8x32xf32>, vector<2x1x8xf32> -> vector<2x1x8xf32>
    "tpu.trace_stop"() : () -> ()
    %16 = math.sqrt %15 : vector<2x1x8xf32>
    %cst_12 = arith.constant 9.99999996E-13 : f32
    %17 = vector.broadcast %cst_12 : f32 to vector<2x1x8xf32>
    %18 = arith.maximumf %16, %17 : vector<2x1x8xf32>
    %19 = tpu.reciprocal %18 : vector<2x1x8xf32> -> vector<2x1x8xf32>
    %20 = arith.mulf %14, %19 : vector<2x1x8xf32>
    %c0_13 = arith.constant 0 : index
    %c0_14 = arith.constant 0 : index
    %21 = vector.load %arg6[%c0_13, %c0_14] : memref<1x1xf32, #tpu.memory_space<vmem>>, vector<1x1xf32>
    %22 = vector.extract %21[0, 0] : f32 from vector<1x1xf32>
    %23 = vector.broadcast %22 : f32 to vector<2x1x8xf32>
    %24 = arith.addf %20, %23 : vector<2x1x8xf32>
    %25 = tpu.iota {dimensions = array<i32: 2>} : vector<2x1x8xi32>
    %c0_15 = arith.constant 0 : index
    %c0_16 = arith.constant 0 : index
    %c0_17 = arith.constant 0 : index
    %26 = vector.load %arg7[%c0_15, %c0_16, %c0_17] : memref<2x1x1xi32, #tpu.memory_space<vmem>>, vector<2x1x1xi32>
    %27 = vector.broadcast %26 : vector<2x1x1xi32> to vector<2x1x8xi32>
    %28 = arith.cmpi sge, %25, %27 : vector<2x1x8xi32>
    %cst_18 = arith.constant -1.000000e+30 : f32
    %29 = vector.broadcast %cst_18 : f32 to vector<2x1x8xf32>
    %30 = arith.select %28, %29, %24 : vector<2x1x8xi1>, vector<2x1x8xf32>
    %cst_19 = arith.constant dense<0xFF800000> : vector<2x1xf32>
    %31 = vector.multi_reduction <maximumf>, %30, %cst_19 [2] : vector<2x1x8xf32> to vector<2x1xf32>
    %32 = vector.shape_cast %31 : vector<2x1xf32> to vector<2x1x1xf32>
    %33 = vector.broadcast %32 : vector<2x1x1xf32> to vector<2x1x8xf32>
    %34 = arith.subf %30, %33 : vector<2x1x8xf32>
    %35 = math.exp %34 : vector<2x1x8xf32>
    %cst_20 = arith.constant dense<0.000000e+00> : vector<2x1xf32>
    %36 = vector.multi_reduction <add>, %35, %cst_20 [2] : vector<2x1x8xf32> to vector<2x1xf32>
    %37 = vector.shape_cast %36 : vector<2x1xf32> to vector<2x1x1xf32>
    %38 = tpu.reciprocal %37 : vector<2x1x1xf32> -> vector<2x1x1xf32>
    %39 = vector.broadcast %38 : vector<2x1x1xf32> to vector<2x1x8xf32>
    %40 = arith.mulf %35, %39 : vector<2x1x8xf32>
    "tpu.trace_start"() <{level = 10 : i32, message = "bkn,bnd->bkd"}> : () -> ()
    %cst_21 = arith.constant dense<0.000000e+00> : vector<2x1x32xf32>
    %41 = tpu.matmul %40, %0, %cst_21 {dimension_numbers = #tpu.dot_dimension_numbers<[2], [1], [1], [2], [0, 0, 0, 1, 1, 2], [0], [0]>} : vector<2x1x8xf32>, vector<2x8x32xf32>, vector<2x1x32xf32> -> vector<2x1x32xf32>
    "tpu.trace_stop"() : () -> ()
    %c0_22 = arith.constant 0 : index
    %c0_23 = arith.constant 0 : index
    %c0_24 = arith.constant 0 : index
    %42 = vector.load %arg8[%c0_22, %c0_23, %c0_24] : memref<2x1x32xf32, #tpu.memory_space<vmem>>, vector<2x1x32xf32>
    tpu.vector_store %arg8[%c0_22, %c0_23, %c0_24], %41 {strides = array<i32>} : memref<2x1x32xf32, #tpu.memory_space<vmem>>, vector<2x1x32xf32>,
    return
  }
  func.func @transform_0(%arg0: i32) -> (i32, i32, i32) {
    %c0_i32 = arith.constant 0 : i32
    %c0_i32_0 = arith.constant 0 : i32
    %c0_i32_1 = arith.constant 0 : i32
    return %arg0, %c0_i32, %c0_i32_0 : i32, i32, i32
  }
  func.func @transform_1(%arg0: i32) -> (i32, i32) {
    %c0_i32 = arith.constant 0 : i32
    %c0_i32_0 = arith.constant 0 : i32
    return %arg0, %c0_i32 : i32, i32
  }
  func.func @transform_2(%arg0: i32) -> (i32, i32) {
    %c0_i32 = arith.constant 0 : i32
    %c0_i32_0 = arith.constant 0 : i32
    %c0_i32_1 = arith.constant 0 : i32
    return %c0_i32, %c0_i32_0 : i32, i32
  }
  func.func @transform_3(%arg0: i32) -> (i32, i32) {
    %c0_i32 = arith.constant 0 : i32
    %c0_i32_0 = arith.constant 0 : i32
    %c0_i32_1 = arith.constant 0 : i32
    return %c0_i32, %c0_i32_0 : i32, i32
  }
  func.func @transform_4(%arg0: i32) -> (i32, i32) {
    %c0_i32 = arith.constant 0 : i32
    %c0_i32_0 = arith.constant 0 : i32
    %c0_i32_1 = arith.constant 0 : i32
    return %c0_i32, %c0_i32_0 : i32, i32
  }
  func.func @transform_5(%arg0: i32) -> (i32, i32) {
    %c0_i32 = arith.constant 0 : i32
    %c0_i32_0 = arith.constant 0 : i32
    %c0_i32_1 = arith.constant 0 : i32
    return %c0_i32, %c0_i32_0 : i32, i32
  }
  func.func @transform_6(%arg0: i32) -> (i32, i32, i32) {
    %c0_i32 = arith.constant 0 : i32
    %c0_i32_0 = arith.constant 0 : i32
    %c0_i32_1 = arith.constant 0 : i32
    return %arg0, %c0_i32, %c0_i32_0 : i32, i32, i32
  }
  func.func @transform_7(%arg0: i32) -> (i32, i32, i32) {
    %c0_i32 = arith.constant 0 : i32
    %c0_i32_0 = arith.constant 0 : i32
    %c0_i32_1 = arith.constant 0 : i32
    return %arg0, %c0_i32, %c0_i32_0 : i32, i32, i32
  }
}

</mosaic_0001>

<llo_original>
// kernel: tpu_custom_call.1
$region0: #{tpu_custom_call.1}
  #allocation0 [shape = 'u32[]', space=smem, size = 0x4, offset = 0x4, fixed_abs, tag = 'smem constant byte address 0x4 - core index']
  #allocation1 [shape = 'u32[144,128]{1,0:T(1,128)}', space=vmem, size = 0x12000, scoped, tag = 'internal scratch']
  #allocation2 [shape = 'f32[1,1]{1,0:T(1,128)S(1)}', space=vmem, size = 0x200, scoped, tag = 'scoped memory for tpu_custom_call.1']
  %s0 = inlined_call_operand.hbm [shape: f32[2,8,32], index: 0, kind: input, shape index: {}]
  %s1 = inlined_call_operand.vmem [shape: f32[2,16], index: 1, kind: input, shape index: {}]
  %s2 = inlined_call_operand.hbm [shape: f32[16,32], index: 2, kind: input, shape index: {}]
  %s3 = inlined_call_operand.vmem [shape: f32[1,32], index: 3, kind: input, shape index: {}]
  %s4 = inlined_call_operand.vmem [shape: f32[1,32], index: 4, kind: input, shape index: {}]
  %s5 = inlined_call_operand.<no memory space> [shape: f32[1,1], index: 5, kind: input, shape index: {}]
  %s6 = inlined_call_operand.vmem [shape: s32[2,1,1], index: 6, kind: input, shape index: {}]
  %s7 = inlined_call_operand.hbm [shape: f32[2,1,32], index: 7, kind: output, shape index: {}]
  %s8 = sld [smem:[#allocation0]]
  $region46: #{tpu_custom_call.1} parent=0
    _
  %s10 = ssub.s32 1, %s8
  %s11 = scalar_select 0, %s10, %s8
  %v12 = vstv %s5
  %13 = vst [vmem:[#allocation2] sm:$0x1] %v12
  $region1: #{tpu_custom_call.1} parent=0
    #allocation3 [shape = 'u8[8192]{0}', space=vmem, size = 0x2000, scoped, tag = 'input window, operand 0, single buffered']
    #allocation4 [shape = 's32[1]{0}', space=sflag, size = 0x4, scoped, tag = 'scoped memory for tpu_custom_call.1']
    #allocation5 [shape = 's32[1]{0}', space=sflag, size = 0x4, scoped, tag = 'scoped memory for tpu_custom_call.1']
    #allocation6 [shape = 'u8[8192]{0}', space=vmem, size = 0x2000, scoped, tag = 'input window, operand 2, single buffered']
    #allocation7 [shape = 's32[1]{0}', space=sflag, size = 0x4, scoped, tag = 'scoped memory for tpu_custom_call.1']
    #allocation8 [shape = 'u8[1024]{0}', space=vmem, size = 0x400, scoped, tag = 'output window, operand 0, single buffered']
    %14 = vsyncpa [#allocation4], 0
    %15 = vsyncpa [#allocation7], 0
    %16 = vsyncpa [#allocation5], 0
    // Predicated region
    $region2: #{tpu_custom_call.1} parent=1 // pred_check
      _
    $region3: #{tpu_custom_call.1} parent=1 // pred_check_branch
      %18 = sbr.rel (0) target = $region5
    $region4: #{tpu_custom_call.1} parent=1 // pred_region
      %s20 = ssub.s32 256, 256
      %21 = vsyncadd [#allocation4], %s20
      %s22 = sshll.u32 [#allocation3], 4
      %s23 = int_to_ptr.vmem [resolvable:$true] %s22
      %28 = dma.hbm_to_vmem [thread:$0]  %s0, 256, %s23, [#allocation4], 128, 128, 8
    $region5: #{tpu_custom_call.1} parent=1 // pred_fallthru
      _
    // Predicated region
    $region6: #{tpu_custom_call.1} parent=1 // pred_check
      _
    $region7: #{tpu_custom_call.1} parent=1 // pred_check_branch
      %30 = sbr.rel (0) target = $region9
    $region8: #{tpu_custom_call.1} parent=1 // pred_region
      _
    $region9: #{tpu_custom_call.1} parent=1 // pred_fallthru
      _
    // Predicated region
    $region10: #{tpu_custom_call.1} parent=1 // pred_check
      _
    $region11: #{tpu_custom_call.1} parent=1 // pred_check_branch
      %32 = sbr.rel (0) target = $region13
    $region12: #{tpu_custom_call.1} parent=1 // pred_region
      %s34 = ssub.s32 256, 256
      %35 = vsyncadd [#allocation7], %s34
      %s36 = sshll.u32 [#allocation6], 4
      %s37 = int_to_ptr.vmem [resolvable:$true] %s36
      %42 = dma.hbm_to_vmem [thread:$0]  %s2, 256, %s37, [#allocation7], 128, 128, 8
    $region13: #{tpu_custom_call.1} parent=1 // pred_fallthru
      _
    // Predicated region
    $region14: #{tpu_custom_call.1} parent=1 // pred_check
      _
    $region15: #{tpu_custom_call.1} parent=1 // pred_check_branch
      %44 = sbr.rel (0) target = $region17
    $region16: #{tpu_custom_call.1} parent=1 // pred_region
      _
    $region17: #{tpu_custom_call.1} parent=1 // pred_fallthru
      _
    // Predicated region
    $region18: #{tpu_custom_call.1} parent=1 // pred_check
      _
    $region19: #{tpu_custom_call.1} parent=1 // pred_check_branch
      %46 = sbr.rel (0) target = $region21
    $region20: #{tpu_custom_call.1} parent=1 // pred_region
      _
    $region21: #{tpu_custom_call.1} parent=1 // pred_fallthru
      _
    // Predicated region
    $region22: #{tpu_custom_call.1} parent=1 // pred_check
      _
    $region23: #{tpu_custom_call.1} parent=1 // pred_check_branch
      %48 = sbr.rel (0) target = $region25
    $region24: #{tpu_custom_call.1} parent=1 // pred_region
      _
    $region25: #{tpu_custom_call.1} parent=1 // pred_fallthru
      _
    // Predicated region
    $region26: #{tpu_custom_call.1} parent=1 // pred_check
      _
    $region27: #{tpu_custom_call.1} parent=1 // pred_check_branch
      %50 = sbr.rel (0) target = $region29
    $region28: #{tpu_custom_call.1} parent=1 // pred_region
      _
    $region29: #{tpu_custom_call.1} parent=1 // pred_fallthru
      _
    // Predicated region
    $region30: #{tpu_custom_call.1} parent=1 // pred_check
      _
    $region31: #{tpu_custom_call.1} parent=1 // pred_check_branch
      %52 = sbr.rel (0) target = $region33
    $region32: #{tpu_custom_call.1} parent=1 // pred_region
      %53 = dma.done [#allocation4], 256
    $region33: #{tpu_custom_call.1} parent=1 // pred_fallthru
      _
    // Predicated region
    $region34: #{tpu_custom_call.1} parent=1 // pred_check
      _
    $region35: #{tpu_custom_call.1} parent=1 // pred_check_branch
      %55 = sbr.rel (0) target = $region37
    $region36: #{tpu_custom_call.1} parent=1 // pred_region
      %56 = dma.done [#allocation7], 256
    $region37: #{tpu_custom_call.1} parent=1 // pred_fallthru
      _
    %v57 = vld [vmem:[#allocation3] sm:$0xff]
    %v58 = vld [vmem:[#allocation3 + $0x8] sm:$0xff]
    %v59 = vld [vmem:[%s1] sm:$0x3]
    %v60 = vld [vmem:[#allocation6] sm:$0xff]
    %v61 = vld [vmem:[#allocation6 + $0x8] sm:$0xff]
    %v62 = vld [vmem:[%s3] sm:$0x1]
    %v64 = vlaneseq
    %v65 = vshrl.u32 %v64, 7
    %v66 = vsub.s32 0, %v65
    %v67 = vrot.slane %v62, %v66
    %vm69 = vcmask 130048
    %v71 = vsel %vm69, %v59, 0
    %73 = vmatprep.subr.mxu0 0.0
    %74 = vmatpush1.msra.mxu0 0.0
    %75 = vmatprep.subr.mxu0 0.0
    %76 = vmatpush1.msra.mxu0 0.0
    %77 = vmatprep.subr.mxu0 0.0
    %78 = vmatpush1.msra.mxu0 0.0
    %79 = vmatprep.subr.mxu0 0.0
    %80 = vmatpush1.msra.mxu0 0.0
    %81 = vmatprep.subr.mxu0 0.0
    %82 = vmatpush1.msra.mxu0 0.0
    %83 = vmatprep.subr.mxu0 0.0
    %84 = vmatpush1.msra.mxu0 0.0
    %85 = vmatprep.subr.mxu0 0.0
    %86 = vmatpush1.msra.mxu0 0.0
    %87 = vmatprep.subr.mxu0 0.0
    %88 = vmatpush1.msra.mxu0 0.0
    %89 = vmatprep.subr.mxu0 0.0
    %90 = vmatpush1.msra.mxu0 0.0
    %91 = vmatprep.subr.mxu0 0.0
    %92 = vmatpush1.msra.mxu0 0.0
    %93 = vmatprep.subr.mxu0 0.0
    %94 = vmatpush1.msra.mxu0 0.0
    %95 = vmatprep.subr.mxu0 0.0
    %96 = vmatpush1.msra.mxu0 0.0
    %97 = vmatprep.subr.mxu0 0.0
    %98 = vmatpush1.msra.mxu0 0.0
    %99 = vmatprep.subr.mxu0 0.0
    %100 = vmatpush1.msra.mxu0 0.0
    %101 = vmatprep.subr.mxu0 0.0
    %102 = vmatpush1.msra.mxu0 %v61
    %103 = vmatprep.subr.mxu0 0.0
    %104 = vmatpush1.msra.mxu0 %v60
    %105 = vmatprep.subr.mxu0 0.0
    %106 = vmatpush2.msra.mxu0 0.0
    %107 = vmatprep.subr.mxu0 0.0
    %108 = vmatpush2.msra.mxu0 0.0
    %109 = vmatprep.subr.mxu0 0.0
    %110 = vmatpush2.msra.mxu0 0.0
    %111 = vmatprep.subr.mxu0 0.0
    %112 = vmatpush2.msra.mxu0 0.0
    %113 = vmatprep.subr.mxu0 0.0
    %114 = vmatpush2.msra.mxu0 0.0
    %115 = vmatprep.subr.mxu0 0.0
    %116 = vmatpush2.msra.mxu0 0.0
    %117 = vmatprep.subr.mxu0 0.0
    %118 = vmatpush2.msra.mxu0 0.0
    %119 = vmatprep.subr.mxu0 0.0
    %120 = vmatpush2.msra.mxu0 0.0
    %121 = vmatprep.subr.mxu0 0.0
    %122 = vmatpush2.msra.mxu0 0.0
    %123 = vmatprep.subr.mxu0 0.0
    %124 = vmatpush2.msra.mxu0 0.0
    %125 = vmatprep.subr.mxu0 0.0
    %126 = vmatpush2.msra.mxu0 0.0
    %127 = vmatprep.subr.mxu0 0.0
    %128 = vmatpush2.msra.mxu0 0.0
    %129 = vmatprep.subr.mxu0 0.0
    %130 = vmatpush2.msra.mxu0 0.0
    %131 = vmatprep.subr.mxu0 0.0
    %132 = vmatpush2.msra.mxu0 0.0
    %133 = vmatprep.subr.mxu0 0.0
    %134 = vmatpush2.msra.mxu0 0.0
    %135 = vmatprep.subr.mxu0 0.0
    %136 = vmatpush2.msra.mxu0 0.0
    %137 = vmatprep.mubr.f32.mxu0 0.0
    %138 = vmatmul.mubr.f32.gmra.mxu0 %v71
    %v139 = vpop.f32.mrf.mxu0
    %v140 = vadd.f32 %v67, %v139
    %v141 = vpop.f32.mrf.mxu0
    %142 = vdwg.mxu0
    %v143 = vld [vmem:[%s4] sm:$0x1]
    %v145 = vlaneseq
    %v146 = vshrl.u32 %v145, 7
    %v147 = vsub.s32 0, %v146
    %v148 = vrot.slane %v143, %v147
    %v150 = vmul.f32 %v140, %v148
    %v153 = vunpack.c.l.s4 1966171168
    %v154 = vunpack.c.0.s8 %v153
    %v155 = vlaneseq
    %v156 = vshrl.u32 %v155, 7
    %v157 = vsub.s32 %v154, %v156
    %v158 = vrot.slane %v150, %v157
    %v159 = vcombine.high %v158, %v158
    %v161 = vunpack.c.l.s4 1966171168
    %v162 = vunpack.c.0.s8 %v161
    %v163 = vlaneseq
    %v164 = vshrl.u32 %v163, 7
    %v165 = vsub.s32 %v162, %v164
    %v166 = vrot.slane %v158, %v165
    %v168 = vunpack.c.l.s4 1966171168
    %v169 = vunpack.c.0.s8 %v168
    %v170 = vlaneseq
    %v171 = vshrl.u32 %v170, 7
    %v172 = vsub.s32 %v169, %v171
    %v173 = vrot.slane %v159, %v172
    %v174 = vmul.f32 %v140, %v140
    %v177 = vunpack.c.l.s4 1966171168
    %v178 = vunpack.c.0.s8 %v177
    %v179 = vlaneseq
    %v180 = vshrl.u32 %v179, 7
    %v181 = vsub.s32 %v178, %v180
    %v182 = vrot.slane %v174, %v181
    %v183 = vcombine.high %v182, %v182
    %v185 = vunpack.c.l.s4 1966171168
    %v186 = vunpack.c.0.s8 %v185
    %v187 = vlaneseq
    %v188 = vshrl.u32 %v187, 7
    %v189 = vsub.s32 %v186, %v188
    %v190 = vrot.slane %v182, %v189
    %v192 = vunpack.c.l.s4 1966171168
    %v193 = vunpack.c.0.s8 %v192
    %v194 = vlaneseq
    %v195 = vshrl.u32 %v194, 7
    %v196 = vsub.s32 %v193, %v195
    %v197 = vrot.slane %v183, %v196
    %v198 = vmul.f32 %v57, %v57
    %v199 = vmul.f32 %v58, %v58
    %vm200 = vcmask 261120
    %v201 = vsel %vm200, %v166, 0
    %v204 = vsel %vm200, %v57, 0
    %206 = vmatprep.subr.mxu0 0.0
    %207 = vmatpush1.xpose.msra.mxu0 0.0
    %208 = vmatprep.subr.mxu0 0.0
    %209 = vmatpush1.xpose.msra.mxu0 0.0
    %210 = vmatprep.subr.mxu0 0.0
    %211 = vmatpush1.xpose.msra.mxu0 0.0
    %212 = vmatprep.subr.mxu0 0.0
    %213 = vmatpush1.xpose.msra.mxu0 0.0
    %214 = vmatprep.subr.mxu0 0.0
    %215 = vmatpush1.xpose.msra.mxu0 0.0
    %216 = vmatprep.subr.mxu0 0.0
    %217 = vmatpush1.xpose.msra.mxu0 0.0
    %218 = vmatprep.subr.mxu0 0.0
    %219 = vmatpush1.xpose.msra.mxu0 0.0
    %220 = vmatprep.subr.mxu0 0.0
    %221 = vmatpush1.xpose.msra.mxu0 0.0
    %222 = vmatprep.subr.mxu0 0.0
    %223 = vmatpush1.xpose.msra.mxu0 0.0
    %224 = vmatprep.subr.mxu0 0.0
    %225 = vmatpush1.xpose.msra.mxu0 0.0
    %226 = vmatprep.subr.mxu0 0.0
    %227 = vmatpush1.xpose.msra.mxu0 0.0
    %228 = vmatprep.subr.mxu0 0.0
    %229 = vmatpush1.xpose.msra.mxu0 0.0
    %230 = vmatprep.subr.mxu0 0.0
    %231 = vmatpush1.xpose.msra.mxu0 0.0
    %232 = vmatprep.subr.mxu0 0.0
    %233 = vmatpush1.xpose.msra.mxu0 0.0
    %234 = vmatprep.subr.mxu0 0.0
    %235 = vmatpush1.xpose.msra.mxu0 0.0
    %236 = vmatprep.subr.mxu0 0.0
    %237 = vmatpush1.xpose.msra.mxu0 %v204
    %238 = vmatprep.subr.mxu0 0.0
    %239 = vmatpush2.xpose.msra.mxu0 0.0
    %240 = vmatprep.subr.mxu0 0.0
    %241 = vmatpush2.xpose.msra.mxu0 0.0
    %242 = vmatprep.subr.mxu0 0.0
    %243 = vmatpush2.xpose.msra.mxu0 0.0
    %244 = vmatprep.subr.mxu0 0.0
    %245 = vmatpush2.xpose.msra.mxu0 0.0
    %246 = vmatprep.subr.mxu0 0.0
    %247 = vmatpush2.xpose.msra.mxu0 0.0
    %248 = vmatprep.subr.mxu0 0.0
    %249 = vmatpush2.xpose.msra.mxu0 0.0
    %250 = vmatprep.subr.mxu0 0.0
    %251 = vmatpush2.xpose.msra.mxu0 0.0
    %252 = vmatprep.subr.mxu0 0.0
    %253 = vmatpush2.xpose.msra.mxu0 0.0
    %254 = vmatprep.subr.mxu0 0.0
    %255 = vmatpush2.xpose.msra.mxu0 0.0
    %256 = vmatprep.subr.mxu0 0.0
    %257 = vmatpush2.xpose.msra.mxu0 0.0
    %258 = vmatprep.subr.mxu0 0.0
    %259 = vmatpush2.xpose.msra.mxu0 0.0
    %260 = vmatprep.subr.mxu0 0.0
    %261 = vmatpush2.xpose.msra.mxu0 0.0
    %262 = vmatprep.subr.mxu0 0.0
    %263 = vmatpush2.xpose.msra.mxu0 0.0
    %264 = vmatprep.subr.mxu0 0.0
    %265 = vmatpush2.xpose.msra.mxu0 0.0
    %266 = vmatprep.subr.mxu0 0.0
    %267 = vmatpush2.xpose.msra.mxu0 0.0
    %268 = vmatprep.subr.mxu0 0.0
    %269 = vmatpush2.xpose.msra.mxu0 0.0
    %270 = vmatprep.mubr.f32.mxu0 0.0
    %271 = vmatmul.mubr.f32.gmra.mxu0 %v201
    %v272 = vpop.f32.mrf.mxu0
    %v273 = vadd.f32 0.0, %v272
    %v274 = vpop.f32.mrf.mxu0
    %275 = vdwg.mxu0
    %v276 = vsel %vm200, %v173, 0
    %v279 = vsel %vm200, %v58, 0
    %281 = vmatprep.subr.mxu0 0.0
    %282 = vmatpush1.xpose.msra.mxu0 0.0
    %283 = vmatprep.subr.mxu0 0.0
    %284 = vmatpush1.xpose.msra.mxu0 0.0
    %285 = vmatprep.subr.mxu0 0.0
    %286 = vmatpush1.xpose.msra.mxu0 0.0
    %287 = vmatprep.subr.mxu0 0.0
    %288 = vmatpush1.xpose.msra.mxu0 0.0
    %289 = vmatprep.subr.mxu0 0.0
    %290 = vmatpush1.xpose.msra.mxu0 0.0
    %291 = vmatprep.subr.mxu0 0.0
    %292 = vmatpush1.xpose.msra.mxu0 0.0
    %293 = vmatprep.subr.mxu0 0.0
    %294 = vmatpush1.xpose.msra.mxu0 0.0
    %295 = vmatprep.subr.mxu0 0.0
    %296 = vmatpush1.xpose.msra.mxu0 0.0
    %297 = vmatprep.subr.mxu0 0.0
    %298 = vmatpush1.xpose.msra.mxu0 0.0
    %299 = vmatprep.subr.mxu0 0.0
    %300 = vmatpush1.xpose.msra.mxu0 0.0
    %301 = vmatprep.subr.mxu0 0.0
    %302 = vmatpush1.xpose.msra.mxu0 0.0
    %303 = vmatprep.subr.mxu0 0.0
    %304 = vmatpush1.xpose.msra.mxu0 0.0
    %305 = vmatprep.subr.mxu0 0.0
    %306 = vmatpush1.xpose.msra.mxu0 0.0
    %307 = vmatprep.subr.mxu0 0.0
    %308 = vmatpush1.xpose.msra.mxu0 0.0
    %309 = vmatprep.subr.mxu0 0.0
    %310 = vmatpush1.xpose.msra.mxu0 0.0
    %311 = vmatprep.subr.mxu0 0.0
    %312 = vmatpush1.xpose.msra.mxu0 %v279
    %313 = vmatprep.subr.mxu0 0.0
    %314 = vmatpush2.xpose.msra.mxu0 0.0
    %315 = vmatprep.subr.mxu0 0.0
    %316 = vmatpush2.xpose.msra.mxu0 0.0
    %317 = vmatprep.subr.mxu0 0.0
    %318 = vmatpush2.xpose.msra.mxu0 0.0
    %319 = vmatprep.subr.mxu0 0.0
    %320 = vmatpush2.xpose.msra.mxu0 0.0
    %321 = vmatprep.subr.mxu0 0.0
    %322 = vmatpush2.xpose.msra.mxu0 0.0
    %323 = vmatprep.subr.mxu0 0.0
    %324 = vmatpush2.xpose.msra.mxu0 0.0
    %325 = vmatprep.subr.mxu0 0.0
    %326 = vmatpush2.xpose.msra.mxu0 0.0
    %327 = vmatprep.subr.mxu0 0.0
    %328 = vmatpush2.xpose.msra.mxu0 0.0
    %329 = vmatprep.subr.mxu0 0.0
    %330 = vmatpush2.xpose.msra.mxu0 0.0
    %331 = vmatprep.subr.mxu0 0.0
    %332 = vmatpush2.xpose.msra.mxu0 0.0
    %333 = vmatprep.subr.mxu0 0.0
    %334 = vmatpush2.xpose.msra.mxu0 0.0
    %335 = vmatprep.subr.mxu0 0.0
    %336 = vmatpush2.xpose.msra.mxu0 0.0
    %337 = vmatprep.subr.mxu0 0.0
    %338 = vmatpush2.xpose.msra.mxu0 0.0
    %339 = vmatprep.subr.mxu0 0.0
    %340 = vmatpush2.xpose.msra.mxu0 0.0
    %341 = vmatprep.subr.mxu0 0.0
    %342 = vmatpush2.xpose.msra.mxu0 0.0
    %343 = vmatprep.subr.mxu0 0.0
    %344 = vmatpush2.xpose.msra.mxu0 0.0
    %345 = vmatprep.mubr.f32.mxu0 0.0
    %346 = vmatmul.mubr.f32.gmra.mxu0 %v276
    %v347 = vpop.f32.mrf.mxu0
    %v348 = vadd.f32 0.0, %v347
    %v349 = vpop.f32.mrf.mxu0
    %350 = vdwg.mxu0
    %v351 = vsel %vm200, %v190, 0
    %v354 = vsel %vm200, %v198, 0
    %356 = vmatprep.subr.mxu0 0.0
    %357 = vmatpush1.xpose.msra.mxu0 0.0
    %358 = vmatprep.subr.mxu0 0.0
    %359 = vmatpush1.xpose.msra.mxu0 0.0
    %360 = vmatprep.subr.mxu0 0.0
    %361 = vmatpush1.xpose.msra.mxu0 0.0
    %362 = vmatprep.subr.mxu0 0.0
    %363 = vmatpush1.xpose.msra.mxu0 0.0
    %364 = vmatprep.subr.mxu0 0.0
    %365 = vmatpush1.xpose.msra.mxu0 0.0
    %366 = vmatprep.subr.mxu0 0.0
    %367 = vmatpush1.xpose.msra.mxu0 0.0
    %368 = vmatprep.subr.mxu0 0.0
    %369 = vmatpush1.xpose.msra.mxu0 0.0
    %370 = vmatprep.subr.mxu0 0.0
    %371 = vmatpush1.xpose.msra.mxu0 0.0
    %372 = vmatprep.subr.mxu0 0.0
    %373 = vmatpush1.xpose.msra.mxu0 0.0
    %374 = vmatprep.subr.mxu0 0.0
    %375 = vmatpush1.xpose.msra.mxu0 0.0
    %376 = vmatprep.subr.mxu0 0.0
    %377 = vmatpush1.xpose.msra.mxu0 0.0
    %378 = vmatprep.subr.mxu0 0.0
    %379 = vmatpush1.xpose.msra.mxu0 0.0
    %380 = vmatprep.subr.mxu0 0.0
    %381 = vmatpush1.xpose.msra.mxu0 0.0
    %382 = vmatprep.subr.mxu0 0.0
    %383 = vmatpush1.xpose.msra.mxu0 0.0
    %384 = vmatprep.subr.mxu0 0.0
    %385 = vmatpush1.xpose.msra.mxu0 0.0
    %386 = vmatprep.subr.mxu0 0.0
    %387 = vmatpush1.xpose.msra.mxu0 %v354
    %388 = vmatprep.subr.mxu0 0.0
    %389 = vmatpush2.xpose.msra.mxu0 0.0
    %390 = vmatprep.subr.mxu0 0.0
    %391 = vmatpush2.xpose.msra.mxu0 0.0
    %392 = vmatprep.subr.mxu0 0.0
    %393 = vmatpush2.xpose.msra.mxu0 0.0
    %394 = vmatprep.subr.mxu0 0.0
    %395 = vmatpush2.xpose.msra.mxu0 0.0
    %396 = vmatprep.subr.mxu0 0.0
    %397 = vmatpush2.xpose.msra.mxu0 0.0
    %398 = vmatprep.subr.mxu0 0.0
    %399 = vmatpush2.xpose.msra.mxu0 0.0
    %400 = vmatprep.subr.mxu0 0.0
    %401 = vmatpush2.xpose.msra.mxu0 0.0
    %402 = vmatprep.subr.mxu0 0.0
    %403 = vmatpush2.xpose.msra.mxu0 0.0
    %404 = vmatprep.subr.mxu0 0.0
    %405 = vmatpush2.xpose.msra.mxu0 0.0
    %406 = vmatprep.subr.mxu0 0.0
    %407 = vmatpush2.xpose.msra.mxu0 0.0
    %408 = vmatprep.subr.mxu0 0.0
    %409 = vmatpush2.xpose.msra.mxu0 0.0
    %410 = vmatprep.subr.mxu0 0.0
    %411 = vmatpush2.xpose.msra.mxu0 0.0
    %412 = vmatprep.subr.mxu0 0.0
    %413 = vmatpush2.xpose.msra.mxu0 0.0
    %414 = vmatprep.subr.mxu0 0.0
    %415 = vmatpush2.xpose.msra.mxu0 0.0
    %416 = vmatprep.subr.mxu0 0.0
    %417 = vmatpush2.xpose.msra.mxu0 0.0
    %418 = vmatprep.subr.mxu0 0.0
    %419 = vmatpush2.xpose.msra.mxu0 0.0
    %420 = vmatprep.mubr.f32.mxu0 0.0
    %421 = vmatmul.mubr.f32.gmra.mxu0 %v351
    %v422 = vpop.f32.mrf.mxu0
    %v423 = vadd.f32 0.0, %v422
    %v424 = vpop.f32.mrf.mxu0
    %425 = vdwg.mxu0
    %v426 = vsel %vm200, %v197, 0
    %v429 = vsel %vm200, %v199, 0
    %431 = vmatprep.subr.mxu0 0.0
    %432 = vmatpush1.xpose.msra.mxu0 0.0
    %433 = vmatprep.subr.mxu0 0.0
    %434 = vmatpush1.xpose.msra.mxu0 0.0
    %435 = vmatprep.subr.mxu0 0.0
    %436 = vmatpush1.xpose.msra.mxu0 0.0
    %437 = vmatprep.subr.mxu0 0.0
    %438 = vmatpush1.xpose.msra.mxu0 0.0
    %439 = vmatprep.subr.mxu0 0.0
    %440 = vmatpush1.xpose.msra.mxu0 0.0
    %441 = vmatprep.subr.mxu0 0.0
    %442 = vmatpush1.xpose.msra.mxu0 0.0
    %443 = vmatprep.subr.mxu0 0.0
    %444 = vmatpush1.xpose.msra.mxu0 0.0
    %445 = vmatprep.subr.mxu0 0.0
    %446 = vmatpush1.xpose.msra.mxu0 0.0
    %447 = vmatprep.subr.mxu0 0.0
    %448 = vmatpush1.xpose.msra.mxu0 0.0
    %449 = vmatprep.subr.mxu0 0.0
    %450 = vmatpush1.xpose.msra.mxu0 0.0
    %451 = vmatprep.subr.mxu0 0.0
    %452 = vmatpush1.xpose.msra.mxu0 0.0
    %453 = vmatprep.subr.mxu0 0.0
    %454 = vmatpush1.xpose.msra.mxu0 0.0
    %455 = vmatprep.subr.mxu0 0.0
    %456 = vmatpush1.xpose.msra.mxu0 0.0
    %457 = vmatprep.subr.mxu0 0.0
    %458 = vmatpush1.xpose.msra.mxu0 0.0
    %459 = vmatprep.subr.mxu0 0.0
    %460 = vmatpush1.xpose.msra.mxu0 0.0
    %461 = vmatprep.subr.mxu0 0.0
    %462 = vmatpush1.xpose.msra.mxu0 %v429
    %463 = vmatprep.subr.mxu0 0.0
    %464 = vmatpush2.xpose.msra.mxu0 0.0
    %465 = vmatprep.subr.mxu0 0.0
    %466 = vmatpush2.xpose.msra.mxu0 0.0
    %467 = vmatprep.subr.mxu0 0.0
    %468 = vmatpush2.xpose.msra.mxu0 0.0
    %469 = vmatprep.subr.mxu0 0.0
    %470 = vmatpush2.xpose.msra.mxu0 0.0
    %471 = vmatprep.subr.mxu0 0.0
    %472 = vmatpush2.xpose.msra.mxu0 0.0
    %473 = vmatprep.subr.mxu0 0.0
    %474 = vmatpush2.xpose.msra.mxu0 0.0
    %475 = vmatprep.subr.mxu0 0.0
    %476 = vmatpush2.xpose.msra.mxu0 0.0
    %477 = vmatprep.subr.mxu0 0.0
    %478 = vmatpush2.xpose.msra.mxu0 0.0
    %479 = vmatprep.subr.mxu0 0.0
    %480 = vmatpush2.xpose.msra.mxu0 0.0
    %481 = vmatprep.subr.mxu0 0.0
    %482 = vmatpush2.xpose.msra.mxu0 0.0
    %483 = vmatprep.subr.mxu0 0.0
    %484 = vmatpush2.xpose.msra.mxu0 0.0
    %485 = vmatprep.subr.mxu0 0.0
    %486 = vmatpush2.xpose.msra.mxu0 0.0
    %487 = vmatprep.subr.mxu0 0.0
    %488 = vmatpush2.xpose.msra.mxu0 0.0
    %489 = vmatprep.subr.mxu0 0.0
    %490 = vmatpush2.xpose.msra.mxu0 0.0
    %491 = vmatprep.subr.mxu0 0.0
    %492 = vmatpush2.xpose.msra.mxu0 0.0
    %493 = vmatprep.subr.mxu0 0.0
    %494 = vmatpush2.xpose.msra.mxu0 0.0
    %495 = vmatprep.mubr.f32.mxu0 0.0
    %496 = vmatmul.mubr.f32.gmra.mxu0 %v426
    %v497 = vpop.f32.mrf.mxu0
    %v498 = vadd.f32 0.0, %v497
    %v499 = vpop.f32.mrf.mxu0
    %500 = vdwg.mxu0
    %v501 = vrsqrt.pop %v423
    %v502 = vmul.f32 %v423, %v501
    %vm503 = vcmp.eq.f32.partialorder %v423, inf
    %v504 = vsel %vm503, %v423, %v502
    %vm505 = vcmp.eq.f32.partialorder %v423, 0.0
    %v506 = vand.u32 %v423, 2147483648
    %v507 = vsel %vm505, %v506, %v504
    %v508 = vrsqrt.pop %v498
    %v509 = vmul.f32 %v498, %v508
    %vm510 = vcmp.eq.f32.partialorder %v498, inf
    %v511 = vsel %vm510, %v498, %v509
    %vm512 = vcmp.eq.f32.partialorder %v498, 0.0
    %v513 = vand.u32 %v498, 2147483648
    %v514 = vsel %vm512, %v513, %v511
    %v515 = vmax.f32 %v507, 1e-12
    %v516 = vmax.f32 %v514, 1e-12
    %v517 = vrcp.pop %v515
    %v518 = vrcp.pop %v516
    %v519 = vmul.f32 %v273, %v517
    %v520 = vmul.f32 %v348, %v518
    %v521 = vld [vmem:[#allocation2] sm:$0x1]
    %s522 = vtos %v521
    %v523 = vstv %s522
    %v524 = vadd.f32 %v519, %v523
    %v525 = vadd.f32 %v520, %v523
    %v526 = vlaneseq
    %v527 = vand.u32 %v526, 127
    %v528 = vld [vmem:[%s6] sm:$0x1]
    %v529 = vld [vmem:[%s6 + $0x1] sm:$0x1]
    %530 = vset.pattern.permute.xlu0 0
    %531 = vperm.xlu0 %530, %v528
    %v532 = vpop.permute.xlu0 %531
    %v533 = vlaneseq
    %v534 = vshrl.u32 %v533, 7
    %v535 = vsub.s32 0, %v534
    %v536 = vrot.slane %v532, %v535
    %537 = vset.pattern.permute.xlu0 0
    %538 = vperm.xlu0 %537, %v529
    %v539 = vpop.permute.xlu0 %538
    %v540 = vlaneseq
    %v541 = vshrl.u32 %v540, 7
    %v542 = vsub.s32 0, %v541
    %v543 = vrot.slane %v539, %v542
    %vm544 = vcmp.ge.s32.totalorder %v527, %v536
    %vm545 = vcmp.ge.s32.totalorder %v527, %v543
    %v546 = vsel %vm544, -1e+30, %v524
    %v547 = vsel %vm545, -1e+30, %v525
    %vm548 = vcmask 57344
    %v549 = vsel %vm548, %v546, -inf
    %550 = vmax.xlane.f32.xlu0 %v549
    %v551 = vpop.xlane.xlu0 %550
    %v552 = vsel %vm548, %v547, -inf
    %553 = vmax.xlane.f32.xlu0 %v552
    %v554 = vpop.xlane.xlu0 %553
    %v555 = vsub.f32 %v546, %v551
    %v556 = vsub.f32 %v547, %v554
    %v557 = vmul.f32 %v555, 1.442695
    %v558 = vpow.pop %v557
    %v559 = vmul.f32 %v556, 1.442695
    %v560 = vpow.pop %v559
    %v561 = vsel %vm548, %v558, 0.0
    %562 = vadd.xlane.f32.xlu0 %v561
    %v563 = vpop.xlane.xlu0 %562
    %v564 = vsel %vm548, %v560, 0.0
    %565 = vadd.xlane.f32.xlu0 %v564
    %v566 = vpop.xlane.xlu0 %565
    %v567 = vrcp.pop %v563
    %v568 = vrcp.pop %v566
    %v569 = vmul.f32 %v558, %v567
    %v570 = vmul.f32 %v560, %v568
    %vm571 = vcmask 64512
    %v573 = vsel %vm571, %v569, 0
    %575 = vmatprep.subr.mxu0 0.0
    %576 = vmatpush1.msra.mxu0 0.0
    %577 = vmatprep.subr.mxu0 0.0
    %578 = vmatpush1.msra.mxu0 0.0
    %579 = vmatprep.subr.mxu0 0.0
    %580 = vmatpush1.msra.mxu0 0.0
    %581 = vmatprep.subr.mxu0 0.0
    %582 = vmatpush1.msra.mxu0 0.0
    %583 = vmatprep.subr.mxu0 0.0
    %584 = vmatpush1.msra.mxu0 0.0
    %585 = vmatprep.subr.mxu0 0.0
    %586 = vmatpush1.msra.mxu0 0.0
    %587 = vmatprep.subr.mxu0 0.0
    %588 = vmatpush1.msra.mxu0 0.0
    %589 = vmatprep.subr.mxu0 0.0
    %590 = vmatpush1.msra.mxu0 0.0
    %591 = vmatprep.subr.mxu0 0.0
    %592 = vmatpush1.msra.mxu0 0.0
    %593 = vmatprep.subr.mxu0 0.0
    %594 = vmatpush1.msra.mxu0 0.0
    %595 = vmatprep.subr.mxu0 0.0
    %596 = vmatpush1.msra.mxu0 0.0
    %597 = vmatprep.subr.mxu0 0.0
    %598 = vmatpush1.msra.mxu0 0.0
    %599 = vmatprep.subr.mxu0 0.0
    %600 = vmatpush1.msra.mxu0 0.0
    %601 = vmatprep.subr.mxu0 0.0
    %602 = vmatpush1.msra.mxu0 0.0
    %603 = vmatprep.subr.mxu0 0.0
    %604 = vmatpush1.msra.mxu0 0.0
    %605 = vmatprep.subr.mxu0 0.0
    %606 = vmatpush1.msra.mxu0 %v57
    %607 = vmatprep.subr.mxu0 0.0
    %608 = vmatpush2.msra.mxu0 0.0
    %609 = vmatprep.subr.mxu0 0.0
    %610 = vmatpush2.msra.mxu0 0.0
    %611 = vmatprep.subr.mxu0 0.0
    %612 = vmatpush2.msra.mxu0 0.0
    %613 = vmatprep.subr.mxu0 0.0
    %614 = vmatpush2.msra.mxu0 0.0
    %615 = vmatprep.subr.mxu0 0.0
    %616 = vmatpush2.msra.mxu0 0.0
    %617 = vmatprep.subr.mxu0 0.0
    %618 = vmatpush2.msra.mxu0 0.0
    %619 = vmatprep.subr.mxu0 0.0
    %620 = vmatpush2.msra.mxu0 0.0
    %621 = vmatprep.subr.mxu0 0.0
    %622 = vmatpush2.msra.mxu0 0.0
    %623 = vmatprep.subr.mxu0 0.0
    %624 = vmatpush2.msra.mxu0 0.0
    %625 = vmatprep.subr.mxu0 0.0
    %626 = vmatpush2.msra.mxu0 0.0
    %627 = vmatprep.subr.mxu0 0.0
    %628 = vmatpush2.msra.mxu0 0.0
    %629 = vmatprep.subr.mxu0 0.0
    %630 = vmatpush2.msra.mxu0 0.0
    %631 = vmatprep.subr.mxu0 0.0
    %632 = vmatpush2.msra.mxu0 0.0
    %633 = vmatprep.subr.mxu0 0.0
    %634 = vmatpush2.msra.mxu0 0.0
    %635 = vmatprep.subr.mxu0 0.0
    %636 = vmatpush2.msra.mxu0 0.0
    %637 = vmatprep.subr.mxu0 0.0
    %638 = vmatpush2.msra.mxu0 0.0
    %639 = vmatprep.mubr.f32.mxu0 0.0
    %640 = vmatmul.mubr.f32.gmra.mxu0 %v573
    %v641 = vpop.f32.mrf.mxu0
    %v642 = vadd.f32 0.0, %v641
    %v643 = vpop.f32.mrf.mxu0
    %644 = vdwg.mxu0
    %v646 = vsel %vm571, %v570, 0
    %648 = vmatprep.subr.mxu0 0.0
    %649 = vmatpush1.msra.mxu0 0.0
    %650 = vmatprep.subr.mxu0 0.0
    %651 = vmatpush1.msra.mxu0 0.0
    %652 = vmatprep.subr.mxu0 0.0
    %653 = vmatpush1.msra.mxu0 0.0
    %654 = vmatprep.subr.mxu0 0.0
    %655 = vmatpush1.msra.mxu0 0.0
    %656 = vmatprep.subr.mxu0 0.0
    %657 = vmatpush1.msra.mxu0 0.0
    %658 = vmatprep.subr.mxu0 0.0
    %659 = vmatpush1.msra.mxu0 0.0
    %660 = vmatprep.subr.mxu0 0.0
    %661 = vmatpush1.msra.mxu0 0.0
    %662 = vmatprep.subr.mxu0 0.0
    %663 = vmatpush1.msra.mxu0 0.0
    %664 = vmatprep.subr.mxu0 0.0
    %665 = vmatpush1.msra.mxu0 0.0
    %666 = vmatprep.subr.mxu0 0.0
    %667 = vmatpush1.msra.mxu0 0.0
    %668 = vmatprep.subr.mxu0 0.0
    %669 = vmatpush1.msra.mxu0 0.0
    %670 = vmatprep.subr.mxu0 0.0
    %671 = vmatpush1.msra.mxu0 0.0
    %672 = vmatprep.subr.mxu0 0.0
    %673 = vmatpush1.msra.mxu0 0.0
    %674 = vmatprep.subr.mxu0 0.0
    %675 = vmatpush1.msra.mxu0 0.0
    %676 = vmatprep.subr.mxu0 0.0
    %677 = vmatpush1.msra.mxu0 0.0
    %678 = vmatprep.subr.mxu0 0.0
    %679 = vmatpush1.msra.mxu0 %v58
    %680 = vmatprep.subr.mxu0 0.0
    %681 = vmatpush2.msra.mxu0 0.0
    %682 = vmatprep.subr.mxu0 0.0
    %683 = vmatpush2.msra.mxu0 0.0
    %684 = vmatprep.subr.mxu0 0.0
    %685 = vmatpush2.msra.mxu0 0.0
    %686 = vmatprep.subr.mxu0 0.0
    %687 = vmatpush2.msra.mxu0 0.0
    %688 = vmatprep.subr.mxu0 0.0
    %689 = vmatpush2.msra.mxu0 0.0
    %690 = vmatprep.subr.mxu0 0.0
    %691 = vmatpush2.msra.mxu0 0.0
    %692 = vmatprep.subr.mxu0 0.0
    %693 = vmatpush2.msra.mxu0 0.0
    %694 = vmatprep.subr.mxu0 0.0
    %695 = vmatpush2.msra.mxu0 0.0
    %696 = vmatprep.subr.mxu0 0.0
    %697 = vmatpush2.msra.mxu0 0.0
    %698 = vmatprep.subr.mxu0 0.0
    %699 = vmatpush2.msra.mxu0 0.0
    %700 = vmatprep.subr.mxu0 0.0
    %701 = vmatpush2.msra.mxu0 0.0
    %702 = vmatprep.subr.mxu0 0.0
    %703 = vmatpush2.msra.mxu0 0.0
    %704 = vmatprep.subr.mxu0 0.0
    %705 = vmatpush2.msra.mxu0 0.0
    %706 = vmatprep.subr.mxu0 0.0
    %707 = vmatpush2.msra.mxu0 0.0
    %708 = vmatprep.subr.mxu0 0.0
    %709 = vmatpush2.msra.mxu0 0.0
    %710 = vmatprep.subr.mxu0 0.0
    %711 = vmatpush2.msra.mxu0 0.0
    %712 = vmatprep.mubr.f32.mxu0 0.0
    %713 = vmatmul.mubr.f32.gmra.mxu0 %v646
    %v714 = vpop.f32.mrf.mxu0
    %v715 = vadd.f32 0.0, %v714
    %v716 = vpop.f32.mrf.mxu0
    %717 = vdwg.mxu0
    %vm718 = vcmask 253952
    %719 = vst.msk [vmem:[#allocation8] sm:$0x1] %vm718, %v642
    %720 = vst.msk [vmem:[#allocation8 + $0x1] sm:$0x1] %vm718, %v715
    // Predicated region
    $region38: #{tpu_custom_call.1} parent=1 // pred_check
      _
    $region39: #{tpu_custom_call.1} parent=1 // pred_check_branch
      %722 = sbr.rel (0) target = $region41
    $region40: #{tpu_custom_call.1} parent=1 // pred_region
      %s724 = ssub.s32 32, 32
      %725 = vsyncadd [#allocation5], %s724
      %s726 = sshll.u32 [#allocation8], 4
      %s727 = int_to_ptr.vmem [resolvable:$true] %s726
      %732 = dma.vmem_to_hbm [thread:$0]  %s727, 32, %s7, [#allocation5], 16, 16, 1
    $region41: #{tpu_custom_call.1} parent=1 // pred_fallthru
      _
    // Predicated region
    $region42: #{tpu_custom_call.1} parent=1 // pred_check
      _
    $region43: #{tpu_custom_call.1} parent=1 // pred_check_branch
      %734 = sbr.rel (0) target = $region45
    $region44: #{tpu_custom_call.1} parent=1 // pred_region
      %735 = dma.done [#allocation5], 32
    $region45: #{tpu_custom_call.1} parent=1 // pred_fallthru
      _
    %736 = vsyncpa [#allocation4], 1
    %737 = vsyncpa [#allocation7], 1
    %738 = vsyncpa [#allocation5], 1

</llo_original>
